<compile_context>
chip_gen: v7x
topology: tpu7x:2x2x1
jax: 0.10.0
libtpu: 0.0.40
codegen_flags: <defaults>
</compile_context>

<pallas_src>
import jax
import jax.numpy as jnp
from jax.experimental import pallas as pl
from jax.experimental.pallas import tpu as pltpu

NUM_FEATURES = 512   # resnet18 fc.in_features
N_CLASSES = 8        # n_classes for the new head (small synthetic choice)

LANE = 128           # TPU lane width
SUBLANE = 8          # f32 sublane height
TB_MAX = 1024        # batch tile cap (x f32 2x4MiB + out bf16 2x256KiB << VMEM)
SMALL_BATCH_THRESHOLD = 64   # below this, fused XLA GEMM+sigmoid wins


def _round_up(n, m):
    return ((n + m - 1) // m) * m


def linear_sigmoid_kernel(x_ref, w_ref, b_ref, o_ref):
    # x_ref: [TB, F] f32 (cast to bf16 in-kernel for the MXU),
    # w_ref: [F, Cpad] bf16, b_ref: [1, Cpad] f32, o_ref: [TB, Cpad] bf16.
    x = x_ref[...].astype(jnp.bfloat16)                       # VPU cast, no HBM pass
    acc = jnp.dot(x, w_ref[...], preferred_element_type=jnp.float32)  # MXU, f32 acc
    z = acc + b_ref[...]                                      # broadcast bias
    e = jnp.exp(-z)                                           # EUP
    o_ref[...] = pl.reciprocal(1.0 + e, approx=True).astype(o_ref.dtype)  # sigmoid


def prepare_head_params(w, b):
    """One-time param prep: transpose + zero-pad to a lane-dense class dim.

    w: [C, F] (nn.Linear layout), b: [C].
    Returns (w_t [F, Cpad] bf16, b2 [1, Cpad] f32).  Padded columns are zero,
    so padded logits are sigmoid(0)=0.5 and get sliced away by the wrapper.
    """
    C, F = w.shape
    c_pad = max(LANE, _round_up(C, LANE))
    w_t = jnp.zeros((F, c_pad), jnp.bfloat16).at[:, :C].set(
        jnp.transpose(w).astype(jnp.bfloat16))
    b2 = jnp.zeros((1, c_pad), jnp.float32).at[0, :C].set(b.astype(jnp.float32))
    return w_t, b2


def resnet18_head(x, w_t, b2, n_classes, *, use_pallas=None):
    """y = sigmoid(x @ w.T + b), returns [B, n_classes] f32.

    x: [B, F] float features; (w_t, b2) from prepare_head_params.
    """
    B, F = x.shape
    c_pad = w_t.shape[1]

    if use_pallas is None:
        use_pallas = B >= SMALL_BATCH_THRESHOLD
    if not use_pallas:
        # Tiny batch: let XLA fuse the GEMM + sigmoid; pallas_call overhead dominates.
        z = jnp.dot(x.astype(jnp.bfloat16), w_t,
                    preferred_element_type=jnp.float32) + b2
        return jax.nn.sigmoid(z)[:, :n_classes]

    # >= 2 grid steps so the parallel batch axis shards across v7x's two TCs.
    tb = min(TB_MAX, _round_up(pl.cdiv(B, 2), SUBLANE))
    nb = pl.cdiv(B, tb)                      # ragged last block handled by Pallas

    cost = pl.CostEstimate(
        flops=2 * B * F * c_pad,
        transcendentals=B * c_pad,
        bytes_accessed=B * F * 4 + F * c_pad * 2 + c_pad * 4 + B * c_pad * 2,
    )

    y_pad = pl.pallas_call(
        linear_sigmoid_kernel,
        out_shape=jax.ShapeDtypeStruct((B, c_pad), jnp.bfloat16),
        grid=(nb,),
        in_specs=[
            pl.BlockSpec((tb, F), lambda i: (i, 0)),        # activation stream
            pl.BlockSpec((F, c_pad), lambda i: (0, 0)),     # weight: VMEM-resident
            pl.BlockSpec((1, c_pad), lambda i: (0, 0)),     # bias: VMEM-resident
        ],
        out_specs=pl.BlockSpec((tb, c_pad), lambda i: (i, 0)),
        compiler_params=pltpu.CompilerParams(
            dimension_semantics=("parallel",)),             # v7x 2-TC sharding
        cost_estimate=cost,
    )(x, w_t, b2)

    return y_pad[:, :n_classes].astype(jnp.float32)


def init_params(key, in_features, n_classes):
    # Deterministic init matching nn.Linear's default: U(-1/sqrt(F), 1/sqrt(F)).
    kw, kb = jax.random.split(key)
    bound = 1.0 / jnp.sqrt(float(in_features))
    w = jax.random.uniform(kw, (n_classes, in_features), jnp.float32, -bound, bound)
    b = jax.random.uniform(kb, (n_classes,), jnp.float32, -bound, bound)
    return w, b


if __name__ == "__main__":
    key = jax.random.PRNGKey(0)
    k_x1, k_x2, k_p = jax.random.split(key, 3)

    w, b = init_params(k_p, NUM_FEATURES, N_CLASSES)
    w_t, b2 = prepare_head_params(w, b)

    def reference(x):
        # Plain-JAX reference with the same bf16 input rounding the MXU uses,
        # but f32 math / f32 output (so bf16-output drift is actually checked).
        x_bf = x.astype(jnp.bfloat16).astype(jnp.float32)
        w_bf = w.astype(jnp.bfloat16).astype(jnp.float32)
        return jax.nn.sigmoid(x_bf @ w_bf.T + b)

    # Case 1: small batch (module-scale shape), forced through the Pallas path
    # so the kernel itself is exercised (auto mode would take the XLA fallback).
    batch = 4
    x_small = jax.random.normal(k_x1, (batch, NUM_FEATURES), jnp.float32)
    y_small = jax.block_until_ready(
        resnet18_head(x_small, w_t, b2, N_CLASSES, use_pallas=True))
    assert y_small.shape == (batch, N_CLASSES)
    assert jnp.allclose(y_small, reference(x_small), atol=5e-3, rtol=5e-3), (
        float(jnp.max(jnp.abs(y_small - reference(x_small)))))

    # Case 2: larger ragged batch — 2 parallel grid steps, masked last block.
    batch_big = 300
    x_big = jax.random.normal(k_x2, (batch_big, NUM_FEATURES), jnp.float32)
    y_big = jax.block_until_ready(resnet18_head(x_big, w_t, b2, N_CLASSES))
    assert y_big.shape == (batch_big, N_CLASSES)
    assert jnp.allclose(y_big, reference(x_big), atol=5e-3, rtol=5e-3), (
        float(jnp.max(jnp.abs(y_big - reference(x_big)))))

    print("KERNEL_OK")
</pallas_src>

<mosaic_0001>
module attributes {stable_mosaic.version = 11 : i64} {
  func.func @linear_sigmoid_kernel(%arg0: i32, %arg1: memref<8x512xf32, #tpu.memory_space<vmem>>, %arg2: memref<512x128xbf16, #tpu.memory_space<vmem>>, %arg3: memref<1x128xf32, #tpu.memory_space<vmem>>, %arg4: memref<8x128xbf16, #tpu.memory_space<vmem>>) attributes {dimension_semantics = [#tpu.dimension_semantics<parallel>], iteration_bounds = array<i64: 1>, scalar_prefetch = 0 : i64, scratch_operands = 0 : i64, tpu.core_type = #tpu.core_type<tc>, window_params = [{transform_indices = @transform_0, window_bounds = array<i64: 8, 512>}, {pipeline_mode = #tpu.pipeline_mode<synchronous>, transform_indices = @transform_1, window_bounds = array<i64: 512, 128>}, {pipeline_mode = #tpu.pipeline_mode<synchronous>, transform_indices = @transform_2, window_bounds = array<i64: 1, 128>}, {transform_indices = @transform_3, window_bounds = array<i64: 8, 128>}]} {
    %c0 = arith.constant 0 : index
    %c0_0 = arith.constant 0 : index
    %0 = vector.load %arg1[%c0, %c0_0] : memref<8x512xf32, #tpu.memory_space<vmem>>, vector<8x512xf32>
    %1 = arith.truncf %0 : vector<8x512xf32> to vector<8x512xbf16>
    %c0_1 = arith.constant 0 : index
    %c0_2 = arith.constant 0 : index
    %2 = vector.load %arg2[%c0_1, %c0_2] : memref<512x128xbf16, #tpu.memory_space<vmem>>, vector<512x128xbf16>
    %cst = arith.constant dense<0.000000e+00> : vector<8x128xf32>
    %3 = tpu.matmul %1, %2, %cst {dimension_numbers = #tpu.dot_dimension_numbers<[1], [0], [0], [1], [0, 0, 1, 1], [], []>} : vector<8x512xbf16>, vector<512x128xbf16>, vector<8x128xf32> -> vector<8x128xf32>
    %c0_3 = arith.constant 0 : index
    %c0_4 = arith.constant 0 : index
    %4 = vector.load %arg3[%c0_3, %c0_4] : memref<1x128xf32, #tpu.memory_space<vmem>>, vector<1x128xf32>
    %5 = vector.broadcast %4 : vector<1x128xf32> to vector<8x128xf32>
    %6 = arith.addf %3, %5 : vector<8x128xf32>
    %cst_5 = arith.constant 0.000000e+00 : f32
    %7 = vector.broadcast %cst_5 : f32 to vector<8x128xf32>
    %8 = arith.subf %7, %6 : vector<8x128xf32>
    %9 = math.exp %8 : vector<8x128xf32>
    %cst_6 = arith.constant 1.000000e+00 : f32
    %10 = vector.broadcast %cst_6 : f32 to vector<8x128xf32>
    %11 = arith.addf %10, %9 : vector<8x128xf32>
    %12 = tpu.reciprocal %11 {approx = true} : vector<8x128xf32> -> vector<8x128xf32>
    %13 = arith.truncf %12 : vector<8x128xf32> to vector<8x128xbf16>
    %c0_7 = arith.constant 0 : index
    %c0_8 = arith.constant 0 : index
    %14 = vector.load %arg4[%c0_7, %c0_8] : memref<8x128xbf16, #tpu.memory_space<vmem>>, vector<8x128xbf16>
    tpu.vector_store %arg4[%c0_7, %c0_8], %13 {strides = array<i32>} : memref<8x128xbf16, #tpu.memory_space<vmem>>, vector<8x128xbf16>,
    return
  }
  func.func @transform_0(%arg0: i32) -> (i32, i32) {
    %c0_i32 = arith.constant 0 : i32
    %c0_i32_0 = arith.constant 0 : i32
    return %arg0, %c0_i32 : i32, i32
  }
  func.func @transform_1(%arg0: i32) -> (i32, i32) {
    %c0_i32 = arith.constant 0 : i32
    %c0_i32_0 = arith.constant 0 : i32
    %c0_i32_1 = arith.constant 0 : i32
    return %c0_i32, %c0_i32_0 : i32, i32
  }
  func.func @transform_2(%arg0: i32) -> (i32, i32) {
    %c0_i32 = arith.constant 0 : i32
    %c0_i32_0 = arith.constant 0 : i32
    %c0_i32_1 = arith.constant 0 : i32
    return %c0_i32, %c0_i32_0 : i32, i32
  }
  func.func @transform_3(%arg0: i32) -> (i32, i32) {
    %c0_i32 = arith.constant 0 : i32
    %c0_i32_0 = arith.constant 0 : i32
    return %arg0, %c0_i32 : i32, i32
  }
}

</mosaic_0001>

<llo_original>
// kernel: tpu_custom_call.1
$region0: #{tpu_custom_call.1}
  #allocation0 [shape = 'u32[]', space=smem, size = 0x4, offset = 0x4, fixed_abs, tag = 'smem constant byte address 0x4 - core index']
  #allocation1 [shape = 'u32[144,128]{1,0:T(1,128)}', space=vmem, size = 0x12000, scoped, tag = 'internal scratch']
  %s0 = inlined_call_operand.hbm [shape: f32[4,512], index: 0, kind: input, shape index: {}]
  %s1 = inlined_call_operand.hbm [shape: bf16[512,128], index: 1, kind: input, shape index: {}]
  %s2 = inlined_call_operand.vmem [shape: f32[1,128], index: 2, kind: input, shape index: {}]
  %s3 = inlined_call_operand.hbm [shape: bf16[4,128], index: 3, kind: output, shape index: {}]
  %s4 = sld [smem:[#allocation0]]
  $region30: #{tpu_custom_call.1} parent=0
    _
  %s6 = ssub.s32 1, %s4
  %s7 = scalar_select 0, %s6, %s4
  $region1: #{tpu_custom_call.1} parent=0
    #allocation2 [shape = 'u8[16384]{0}', space=vmem, size = 0x4000, scoped, tag = 'input window, operand 0, single buffered']
    #allocation3 [shape = 's32[1]{0}', space=sflag, size = 0x4, scoped, tag = 'scoped memory for tpu_custom_call.1']
    #allocation4 [shape = 's32[1]{0}', space=sflag, size = 0x4, scoped, tag = 'scoped memory for tpu_custom_call.1']
    #allocation5 [shape = 'u8[131072]{0}', space=vmem, size = 0x20000, scoped, tag = 'input window, operand 1, single buffered']
    #allocation6 [shape = 's32[1]{0}', space=sflag, size = 0x4, scoped, tag = 'scoped memory for tpu_custom_call.1']
    #allocation7 [shape = 'u8[2048]{0}', space=vmem, size = 0x800, scoped, tag = 'output window, operand 0, single buffered']
    %8 = vsyncpa [#allocation3], 0
    %9 = vsyncpa [#allocation6], 0
    %10 = vsyncpa [#allocation4], 0
    // Predicated region
    $region2: #{tpu_custom_call.1} parent=1 // pred_check
      _
    $region3: #{tpu_custom_call.1} parent=1 // pred_check_branch
      %12 = sbr.rel (0) target = $region5
    $region4: #{tpu_custom_call.1} parent=1 // pred_region
      %s14 = ssub.s32 512, 256
      %15 = vsyncadd [#allocation3], %s14
      %s16 = sshll.u32 [#allocation2], 4
      %s17 = int_to_ptr.vmem [resolvable:$true] %s16
      %22 = dma.hbm_to_vmem [thread:$0]  %s0, 256, %s17, [#allocation3], 256, 256, 16
    $region5: #{tpu_custom_call.1} parent=1 // pred_fallthru
      _
    // Predicated region
    $region6: #{tpu_custom_call.1} parent=1 // pred_check
      _
    $region7: #{tpu_custom_call.1} parent=1 // pred_check_branch
      %24 = sbr.rel (0) target = $region9
    $region8: #{tpu_custom_call.1} parent=1 // pred_region
      %s26 = ssub.s32 4096, 4096
      %27 = vsyncadd [#allocation6], %s26
      %s28 = sshll.u32 [#allocation5], 4
      %s29 = int_to_ptr.vmem [resolvable:$true] %s28
      %34 = dma.hbm_to_vmem [thread:$0]  %s1, 4096, %s29, [#allocation6], 64, 64, 4
    $region9: #{tpu_custom_call.1} parent=1 // pred_fallthru
      _
    // Predicated region
    $region10: #{tpu_custom_call.1} parent=1 // pred_check
      _
    $region11: #{tpu_custom_call.1} parent=1 // pred_check_branch
      %36 = sbr.rel (0) target = $region13
    $region12: #{tpu_custom_call.1} parent=1 // pred_region
      _
    $region13: #{tpu_custom_call.1} parent=1 // pred_fallthru
      _
    // Predicated region
    $region14: #{tpu_custom_call.1} parent=1 // pred_check
      _
    $region15: #{tpu_custom_call.1} parent=1 // pred_check_branch
      %38 = sbr.rel (0) target = $region17
    $region16: #{tpu_custom_call.1} parent=1 // pred_region
      %39 = dma.done [#allocation3], 512
    $region17: #{tpu_custom_call.1} parent=1 // pred_fallthru
      _
    // Predicated region
    $region18: #{tpu_custom_call.1} parent=1 // pred_check
      _
    $region19: #{tpu_custom_call.1} parent=1 // pred_check_branch
      %41 = sbr.rel (0) target = $region21
    $region20: #{tpu_custom_call.1} parent=1 // pred_region
      %42 = dma.done [#allocation6], 4096
    $region21: #{tpu_custom_call.1} parent=1 // pred_fallthru
      _
    %v44 = vld [vmem:[#allocation2] sm:$0xff]
    %v45 = vld [vmem:[#allocation2 + $0x8] sm:$0xff]
    %v46 = vld [vmem:[#allocation2 + $0x10] sm:$0xff]
    %v47 = vld [vmem:[#allocation2 + $0x18] sm:$0xff]
    %v52 = vcombine.low %v44, %v46
    %v53 = vcombine.high %v44, %v46
    %v54 = vcombine.low %v45, %v47
    %v55 = vcombine.high %v45, %v47
    %v60 = vpack.c.bf16 %v52, %v52
    %v61 = vpack.c.bf16 %v53, %v53
    %v62 = vpack.c.bf16 %v54, %v54
    %v63 = vpack.c.bf16 %v55, %v55
    %v64 = vld [vmem:[#allocation5] sm:$0xf]
    %v65 = vld [vmem:[#allocation5 + $0x4] sm:$0xf]
    %v66 = vld [vmem:[#allocation5 + $0x8] sm:$0xf]
    %v67 = vld [vmem:[#allocation5 + $0xc] sm:$0xf]
    %v68 = vld [vmem:[#allocation5 + $0x10] sm:$0xf]
    %v69 = vld [vmem:[#allocation5 + $0x14] sm:$0xf]
    %v70 = vld [vmem:[#allocation5 + $0x18] sm:$0xf]
    %v71 = vld [vmem:[#allocation5 + $0x1c] sm:$0xf]
    %v72 = vld [vmem:[#allocation5 + $0x20] sm:$0xf]
    %v73 = vld [vmem:[#allocation5 + $0x24] sm:$0xf]
    %v74 = vld [vmem:[#allocation5 + $0x28] sm:$0xf]
    %v75 = vld [vmem:[#allocation5 + $0x2c] sm:$0xf]
    %v76 = vld [vmem:[#allocation5 + $0x30] sm:$0xf]
    %v77 = vld [vmem:[#allocation5 + $0x34] sm:$0xf]
    %v78 = vld [vmem:[#allocation5 + $0x38] sm:$0xf]
    %v79 = vld [vmem:[#allocation5 + $0x3c] sm:$0xf]
    %v80 = vld [vmem:[#allocation5 + $0x40] sm:$0xf]
    %v81 = vld [vmem:[#allocation5 + $0x44] sm:$0xf]
    %v82 = vld [vmem:[#allocation5 + $0x48] sm:$0xf]
    %v83 = vld [vmem:[#allocation5 + $0x4c] sm:$0xf]
    %v84 = vld [vmem:[#allocation5 + $0x50] sm:$0xf]
    %v85 = vld [vmem:[#allocation5 + $0x54] sm:$0xf]
    %v86 = vld [vmem:[#allocation5 + $0x58] sm:$0xf]
    %v87 = vld [vmem:[#allocation5 + $0x5c] sm:$0xf]
    %v88 = vld [vmem:[#allocation5 + $0x60] sm:$0xf]
    %v89 = vld [vmem:[#allocation5 + $0x64] sm:$0xf]
    %v90 = vld [vmem:[#allocation5 + $0x68] sm:$0xf]
    %v91 = vld [vmem:[#allocation5 + $0x6c] sm:$0xf]
    %v92 = vld [vmem:[#allocation5 + $0x70] sm:$0xf]
    %v93 = vld [vmem:[#allocation5 + $0x74] sm:$0xf]
    %v94 = vld [vmem:[#allocation5 + $0x78] sm:$0xf]
    %v95 = vld [vmem:[#allocation5 + $0x7c] sm:$0xf]
    %v96 = vld [vmem:[#allocation5 + $0x80] sm:$0xf]
    %v97 = vld [vmem:[#allocation5 + $0x84] sm:$0xf]
    %v98 = vld [vmem:[#allocation5 + $0x88] sm:$0xf]
    %v99 = vld [vmem:[#allocation5 + $0x8c] sm:$0xf]
    %v100 = vld [vmem:[#allocation5 + $0x90] sm:$0xf]
    %v101 = vld [vmem:[#allocation5 + $0x94] sm:$0xf]
    %v102 = vld [vmem:[#allocation5 + $0x98] sm:$0xf]
    %v103 = vld [vmem:[#allocation5 + $0x9c] sm:$0xf]
    %v104 = vld [vmem:[#allocation5 + $0xa0] sm:$0xf]
    %v105 = vld [vmem:[#allocation5 + $0xa4] sm:$0xf]
    %v106 = vld [vmem:[#allocation5 + $0xa8] sm:$0xf]
    %v107 = vld [vmem:[#allocation5 + $0xac] sm:$0xf]
    %v108 = vld [vmem:[#allocation5 + $0xb0] sm:$0xf]
    %v109 = vld [vmem:[#allocation5 + $0xb4] sm:$0xf]
    %v110 = vld [vmem:[#allocation5 + $0xb8] sm:$0xf]
    %v111 = vld [vmem:[#allocation5 + $0xbc] sm:$0xf]
    %v112 = vld [vmem:[#allocation5 + $0xc0] sm:$0xf]
    %v113 = vld [vmem:[#allocation5 + $0xc4] sm:$0xf]
    %v114 = vld [vmem:[#allocation5 + $0xc8] sm:$0xf]
    %v115 = vld [vmem:[#allocation5 + $0xcc] sm:$0xf]
    %v116 = vld [vmem:[#allocation5 + $0xd0] sm:$0xf]
    %v117 = vld [vmem:[#allocation5 + $0xd4] sm:$0xf]
    %v118 = vld [vmem:[#allocation5 + $0xd8] sm:$0xf]
    %v119 = vld [vmem:[#allocation5 + $0xdc] sm:$0xf]
    %v120 = vld [vmem:[#allocation5 + $0xe0] sm:$0xf]
    %v121 = vld [vmem:[#allocation5 + $0xe4] sm:$0xf]
    %v122 = vld [vmem:[#allocation5 + $0xe8] sm:$0xf]
    %v123 = vld [vmem:[#allocation5 + $0xec] sm:$0xf]
    %v124 = vld [vmem:[#allocation5 + $0xf0] sm:$0xf]
    %v125 = vld [vmem:[#allocation5 + $0xf4] sm:$0xf]
    %v126 = vld [vmem:[#allocation5 + $0xf8] sm:$0xf]
    %v127 = vld [vmem:[#allocation5 + $0xfc] sm:$0xf]
    %v128 = vld [vmem:[%s2] sm:$0x1]
    %v130 = vlaneseq
    %v131 = vshrl.u32 %v130, 7
    %v132 = vsub.s32 0, %v131
    %v133 = vrot.slane %v128, %v132
    %v199 = vunpack.c.l.b16 %v64
    %v200 = vunpack.c.l.b16 %v65
    %v201 = vunpack.c.l.b16 %v66
    %v202 = vunpack.c.l.b16 %v67
    %v203 = vunpack.c.l.b16 %v68
    %v204 = vunpack.c.l.b16 %v69
    %v205 = vunpack.c.l.b16 %v70
    %v206 = vunpack.c.l.b16 %v71
    %v207 = vunpack.c.l.b16 %v72
    %v208 = vunpack.c.l.b16 %v73
    %v209 = vunpack.c.l.b16 %v74
    %v210 = vunpack.c.l.b16 %v75
    %v211 = vunpack.c.l.b16 %v76
    %v212 = vunpack.c.l.b16 %v77
    %v213 = vunpack.c.l.b16 %v78
    %v214 = vunpack.c.l.b16 %v79
    %v215 = vunpack.c.l.b16 %v80
    %v216 = vunpack.c.l.b16 %v81
    %v217 = vunpack.c.l.b16 %v82
    %v218 = vunpack.c.l.b16 %v83
    %v219 = vunpack.c.l.b16 %v84
    %v220 = vunpack.c.l.b16 %v85
    %v221 = vunpack.c.l.b16 %v86
    %v222 = vunpack.c.l.b16 %v87
    %v223 = vunpack.c.l.b16 %v88
    %v224 = vunpack.c.l.b16 %v89
    %v225 = vunpack.c.l.b16 %v90
    %v226 = vunpack.c.l.b16 %v91
    %v227 = vunpack.c.l.b16 %v92
    %v228 = vunpack.c.l.b16 %v93
    %v229 = vunpack.c.l.b16 %v94
    %v230 = vunpack.c.l.b16 %v95
    %v231 = vunpack.c.l.b16 %v96
    %v232 = vunpack.c.l.b16 %v97
    %v233 = vunpack.c.l.b16 %v98
    %v234 = vunpack.c.l.b16 %v99
    %v235 = vunpack.c.l.b16 %v100
    %v236 = vunpack.c.l.b16 %v101
    %v237 = vunpack.c.l.b16 %v102
    %v238 = vunpack.c.l.b16 %v103
    %v239 = vunpack.c.l.b16 %v104
    %v240 = vunpack.c.l.b16 %v105
    %v241 = vunpack.c.l.b16 %v106
    %v242 = vunpack.c.l.b16 %v107
    %v243 = vunpack.c.l.b16 %v108
    %v244 = vunpack.c.l.b16 %v109
    %v245 = vunpack.c.l.b16 %v110
    %v246 = vunpack.c.l.b16 %v111
    %v247 = vunpack.c.l.b16 %v112
    %v248 = vunpack.c.l.b16 %v113
    %v249 = vunpack.c.l.b16 %v114
    %v250 = vunpack.c.l.b16 %v115
    %v251 = vunpack.c.l.b16 %v116
    %v252 = vunpack.c.l.b16 %v117
    %v253 = vunpack.c.l.b16 %v118
    %v254 = vunpack.c.l.b16 %v119
    %v255 = vunpack.c.l.b16 %v120
    %v256 = vunpack.c.l.b16 %v121
    %v257 = vunpack.c.l.b16 %v122
    %v258 = vunpack.c.l.b16 %v123
    %v259 = vunpack.c.l.b16 %v124
    %v260 = vunpack.c.l.b16 %v125
    %v261 = vunpack.c.l.b16 %v126
    %v262 = vunpack.c.l.b16 %v127
    %v263 = vpack.c.b16 %v200, %v199
    %v264 = vpack.c.b16 %v202, %v201
    %v265 = vpack.c.b16 %v204, %v203
    %v266 = vpack.c.b16 %v206, %v205
    %v267 = vpack.c.b16 %v208, %v207
    %v268 = vpack.c.b16 %v210, %v209
    %v269 = vpack.c.b16 %v212, %v211
    %v270 = vpack.c.b16 %v214, %v213
    %v271 = vpack.c.b16 %v216, %v215
    %v272 = vpack.c.b16 %v218, %v217
    %v273 = vpack.c.b16 %v220, %v219
    %v274 = vpack.c.b16 %v222, %v221
    %v275 = vpack.c.b16 %v224, %v223
    %v276 = vpack.c.b16 %v226, %v225
    %v277 = vpack.c.b16 %v228, %v227
    %v278 = vpack.c.b16 %v230, %v229
    %v279 = vpack.c.b16 %v232, %v231
    %v280 = vpack.c.b16 %v234, %v233
    %v281 = vpack.c.b16 %v236, %v235
    %v282 = vpack.c.b16 %v238, %v237
    %v283 = vpack.c.b16 %v240, %v239
    %v284 = vpack.c.b16 %v242, %v241
    %v285 = vpack.c.b16 %v244, %v243
    %v286 = vpack.c.b16 %v246, %v245
    %v287 = vpack.c.b16 %v248, %v247
    %v288 = vpack.c.b16 %v250, %v249
    %v289 = vpack.c.b16 %v252, %v251
    %v290 = vpack.c.b16 %v254, %v253
    %v291 = vpack.c.b16 %v256, %v255
    %v292 = vpack.c.b16 %v258, %v257
    %v293 = vpack.c.b16 %v260, %v259
    %v294 = vpack.c.b16 %v262, %v261
    %327 = vmatprep.subr.bf16.mxu0 0
    %328 = vmatpush1.bf16.msra.mxu0 %v263
    %329 = vmatprep.subr.bf16.mxu0 0
    %330 = vmatpush1.bf16.msra.mxu0 %v264
    %331 = vmatprep.subr.bf16.mxu0 0
    %332 = vmatpush1.bf16.msra.mxu0 %v265
    %333 = vmatprep.subr.bf16.mxu0 0
    %334 = vmatpush1.bf16.msra.mxu0 %v266
    %335 = vmatprep.subr.bf16.mxu0 0
    %336 = vmatpush1.bf16.msra.mxu0 %v267
    %337 = vmatprep.subr.bf16.mxu0 0
    %338 = vmatpush1.bf16.msra.mxu0 %v268
    %339 = vmatprep.subr.bf16.mxu0 0
    %340 = vmatpush1.bf16.msra.mxu0 %v269
    %341 = vmatprep.subr.bf16.mxu0 0
    %342 = vmatpush1.bf16.msra.mxu0 %v270
    %343 = vmatprep.subr.bf16.mxu0 0
    %344 = vmatpush1.bf16.msra.mxu0 %v271
    %345 = vmatprep.subr.bf16.mxu0 0
    %346 = vmatpush1.bf16.msra.mxu0 %v272
    %347 = vmatprep.subr.bf16.mxu0 0
    %348 = vmatpush1.bf16.msra.mxu0 %v273
    %349 = vmatprep.subr.bf16.mxu0 0
    %350 = vmatpush1.bf16.msra.mxu0 %v274
    %351 = vmatprep.subr.bf16.mxu0 0
    %352 = vmatpush1.bf16.msra.mxu0 %v275
    %353 = vmatprep.subr.bf16.mxu0 0
    %354 = vmatpush1.bf16.msra.mxu0 %v276
    %355 = vmatprep.subr.bf16.mxu0 0
    %356 = vmatpush1.bf16.msra.mxu0 %v277
    %357 = vmatprep.subr.bf16.mxu0 0
    %358 = vmatpush1.bf16.msra.mxu0 %v278
    %359 = vmatprep.mubr.bf16.mxu0 %v61
    %360 = vmatmul.mubr.bf16.gmra.mrb[0].mxu0 %v60
    %v361 = vpop.f32.mrb[0].mxu0
    %v362 = vadd.f32 %v133, %v361
    %v363 = vpop.f32.mrb[0].mxu0
    %v364 = vpop.f32.mrb[0].mxu0
    %v365 = vpop.f32.mrb[0].mxu0
    %366 = vdwg.mxu0
    %367 = vmatprep.subr.bf16.mxu0 0
    %368 = vmatpush1.bf16.msra.mxu0 %v279
    %369 = vmatprep.subr.bf16.mxu0 0
    %370 = vmatpush1.bf16.msra.mxu0 %v280
    %371 = vmatprep.subr.bf16.mxu0 0
    %372 = vmatpush1.bf16.msra.mxu0 %v281
    %373 = vmatprep.subr.bf16.mxu0 0
    %374 = vmatpush1.bf16.msra.mxu0 %v282
    %375 = vmatprep.subr.bf16.mxu0 0
    %376 = vmatpush1.bf16.msra.mxu0 %v283
    %377 = vmatprep.subr.bf16.mxu0 0
    %378 = vmatpush1.bf16.msra.mxu0 %v284
    %379 = vmatprep.subr.bf16.mxu0 0
    %380 = vmatpush1.bf16.msra.mxu0 %v285
    %381 = vmatprep.subr.bf16.mxu0 0
    %382 = vmatpush1.bf16.msra.mxu0 %v286
    %383 = vmatprep.subr.bf16.mxu0 0
    %384 = vmatpush1.bf16.msra.mxu0 %v287
    %385 = vmatprep.subr.bf16.mxu0 0
    %386 = vmatpush1.bf16.msra.mxu0 %v288
    %387 = vmatprep.subr.bf16.mxu0 0
    %388 = vmatpush1.bf16.msra.mxu0 %v289
    %389 = vmatprep.subr.bf16.mxu0 0
    %390 = vmatpush1.bf16.msra.mxu0 %v290
    %391 = vmatprep.subr.bf16.mxu0 0
    %392 = vmatpush1.bf16.msra.mxu0 %v291
    %393 = vmatprep.subr.bf16.mxu0 0
    %394 = vmatpush1.bf16.msra.mxu0 %v292
    %395 = vmatprep.subr.bf16.mxu0 0
    %396 = vmatpush1.bf16.msra.mxu0 %v293
    %397 = vmatprep.subr.bf16.mxu0 0
    %398 = vmatpush1.bf16.msra.mxu0 %v294
    %399 = vmatprep.mubr.bf16.mxu0 %v63
    %400 = vmatmul.mubr.bf16.gmra.mrb[0].mxu0 %v62
    %v401 = vpop.f32.mrb[0].mxu0
    %v402 = vadd.f32 %v362, %v401
    %v403 = vpop.f32.mrb[0].mxu0
    %v404 = vpop.f32.mrb[0].mxu0
    %v405 = vpop.f32.mrb[0].mxu0
    %406 = vdwg.mxu0
    %v407 = vsub.f32 0.0, %v402
    %v408 = vmul.f32 %v407, 1.442695
    %v409 = vpow.pop %v408
    %v410 = vadd.f32 %v409, 1.0
    %v411 = vrcp.pop %v410
    %v412 = vpack.c.bf16 %v411, %v411
    %v415 = vunpack.c.l.s4 1983009808
    %v416 = vunpack.c.0.s8 %v415
    %v417 = vlaneseq
    %v418 = vshrl.u32 %v417, 7
    %v419 = vsub.s32 %v416, %v418
    %v420 = vrot.slane %v412, %v419
    %v421 = vcombine.high %v420, %v420
    %424 = vst [vmem:[#allocation7] sm:$0x3] %v420
    %425 = vst [vmem:[#allocation7 + $0x2] sm:$0x3] %v421
    // Predicated region
    $region22: #{tpu_custom_call.1} parent=1 // pred_check
      _
    $region23: #{tpu_custom_call.1} parent=1 // pred_check_branch
      %427 = sbr.rel (0) target = $region25
    $region24: #{tpu_custom_call.1} parent=1 // pred_region
      %s429 = ssub.s32 64, 32
      %430 = vsyncadd [#allocation4], %s429
      %s431 = sshll.u32 [#allocation7], 4
      %s432 = int_to_ptr.vmem [resolvable:$true] %s431
      %437 = dma.vmem_to_hbm [thread:$0]  %s432, 32, %s3, [#allocation4], 32, 32, 2
    $region25: #{tpu_custom_call.1} parent=1 // pred_fallthru
      _
    // Predicated region
    $region26: #{tpu_custom_call.1} parent=1 // pred_check
      _
    $region27: #{tpu_custom_call.1} parent=1 // pred_check_branch
      %439 = sbr.rel (0) target = $region29
    $region28: #{tpu_custom_call.1} parent=1 // pred_region
      %440 = dma.done [#allocation4], 64
    $region29: #{tpu_custom_call.1} parent=1 // pred_fallthru
      _
    %441 = vsyncpa [#allocation3], 1
    %442 = vsyncpa [#allocation6], 1
    %443 = vsyncpa [#allocation4], 1

</llo_original>
